<compile_context>
chip_gen: v5e
topology: v5e:2x2
jax: 0.10.0
libtpu: 0.0.40
codegen_flags: <defaults>
</compile_context>

<pallas_src>
import functools

import jax
import jax.numpy as jnp
from jax import lax
from jax.experimental import pallas as pl
from jax.experimental.pallas import tpu as pltpu

_MASK_VALUE = -1e30  # large finite negative for padded class columns


def _round_up(x, m):
    return ((x + m - 1) // m) * m


def _tpu_defaults():
    """Per-generation batch/class tile defaults + usable VMEM limit."""
    vmem_cap = 64 * 1024 * 1024            # conservative default: v7x per-TC
    try:
        vmem_cap = int(getattr(pltpu.get_tpu_info(), "vmem_capacity_bytes",
                               vmem_cap))
    except Exception:
        pass
    kind = ""
    try:
        kind = jax.devices()[0].device_kind.lower()
    except Exception:
        pass
    if "v5" in kind:
        tm = 256            # 197 TF/s / 0.82 TB/s  -> ~256 FLOP/byte roofline
    elif "v6" in kind:
        tm = 768            # 918 TF/s / 1.4 TB/s   -> ~640+, 256-multiple MXU
    else:
        tm = 512            # v7x / unknown: 256-multiple, 64 MiB VMEM cap
    tc = 1024 if vmem_cap > 96 * 1024 * 1024 else 512
    # Headroom for Mosaic internal scratch: ~54 MiB on v7x, ~108 MiB v5e/v6e.
    vmem_limit = min(int(vmem_cap * 0.85), vmem_cap - 8 * 1024 * 1024)
    return tm, tc, vmem_limit


def _fit_tiles(tm, tc, D, vmem_budget):
    """Shrink (tm, tc) until the per-step VMEM working set fits the budget."""
    def usage(tm_, tc_):
        emb = 2 * tm_ * D * 2                       # double-buffered bf16
        w = 2 * tc_ * D * 2                         # double-buffered bf16
        logits = tm_ * tc_ * 4                      # f32 logits temp
        small = 6 * tm_ * 128 * 4 + 2 * 8 * tc_ * 4  # tgt/out/scratch/bias
        return emb + w + logits + small
    while usage(tm, tc) > vmem_budget and tc > 128:
        tc = max(128, (tc // 2 // 128) * 128)
    while usage(tm, tc) > vmem_budget and tm > 8:
        tm = max(8, (tm // 2 // 8) * 8)
    return tm, tc


def softmax_loss_kernel(emb_ref, w_ref, b_ref, tgt_ref, out_ref,
                        m_sc, l_sc, t_sc, *, num_rows, inv_b):
    bi = pl.program_id(0)          # batch tile   ("parallel")
    ci = pl.program_id(1)          # class tile   ("arbitrary", reduction)
    nc = pl.num_programs(1)

    tm = emb_ref.shape[0]
    tc = w_ref.shape[0]

    @pl.when(ci == 0)
    def _init():
        m_sc[...] = jnp.full(m_sc.shape, _MASK_VALUE, dtype=m_sc.dtype)
        l_sc[...] = jnp.zeros(l_sc.shape, dtype=l_sc.dtype)
        t_sc[...] = jnp.zeros(t_sc.shape, dtype=t_sc.dtype)

    # (tm, tc) logits on the MXU: bf16 operands, contract on D (last dim of
    # both operands, i.e. emb @ w.T in the native (C, D) weight layout).
    logits = lax.dot_general(
        emb_ref[...], w_ref[...],
        dimension_numbers=(((1,), (1,)), ((), ())),
        preferred_element_type=jnp.float32)
    # Padded weight rows are zero and the bias is padded with _MASK_VALUE, so
    # padded class columns become exactly _MASK_VALUE here -- no extra mask.
    logits = logits + b_ref[...]

    # Online (streaming) log-sum-exp over the class dimension.
    tile_max = jnp.max(logits, axis=-1, keepdims=True)           # (tm, 1)
    m_new = jnp.maximum(m_sc[...], tile_max)
    alpha = jnp.exp(m_sc[...] - m_new)
    p = jnp.exp(logits - m_new)                                  # masked -> 0
    l_sc[...] = alpha * l_sc[...] + jnp.sum(p, axis=-1, keepdims=True)
    m_sc[...] = m_new

    # Accumulate the target logit via a one-hot compare on the global column
    # index (padded columns can never match since target < C).
    col = ci * tc + lax.broadcasted_iota(jnp.int32, (1, tc), 1)  # (1, tc)
    hit = col == tgt_ref[...]                                    # (tm, tc)
    t_sc[...] += jnp.sum(jnp.where(hit, logits, 0.0), axis=-1, keepdims=True)

    @pl.when(ci == nc - 1)
    def _finalize():
        # per-row NLL = logsumexp - target_logit, pre-scaled by 1/B; padded
        # batch rows contribute 0 so the wrapper can just sum.
        nll = m_sc[...] + jnp.log(l_sc[...]) - t_sc[...]         # (tm, 1)
        row = bi * tm + lax.broadcasted_iota(jnp.int32, (tm, 1), 0)
        nll = jnp.where(row < num_rows, nll, 0.0)
        out_ref[...] = nll * inv_b


@functools.partial(jax.jit, static_argnames=("tm", "tc"))
def softmax_loss(embedding, weight, bias, target, *, tm=None, tc=None):
    """embedding: (B, D) f32; weight: (C, D) (nn.Linear layout); bias: (C,);
    target: (B,) int; returns mean cross-entropy (scalar f32)."""
    B, D = embedding.shape
    C = weight.shape[0]

    tm_def, tc_def, vmem_limit = _tpu_defaults()
    tm = tm_def if tm is None else tm
    tc = tc_def if tc is None else tc
    # Clamp to the (padded) problem size, keeping (8, 128) alignment.
    # NOTE(v7x): for modest B, pass a smaller tm so nb >= 2 and the "parallel"
    # batch axis shards across both TensorCores.
    tm = max(8, min(tm, _round_up(B, 8)))
    tc = max(128, min(tc, _round_up(C, 128)))
    tm, tc = _fit_tiles(tm, tc, D, int(vmem_limit * 0.75))

    nb = pl.cdiv(B, tm)
    nc = pl.cdiv(C, tc)
    Bp, Cp = nb * tm, nc * tc

    # bf16 operands in HBM (halve weight traffic); f32 bias / accumulation.
    # Weight kept in native (C, D) layout: no wrapper transpose round trip.
    # TODO(synk): in real training store the head weight as bf16 state so the
    # cast+pad (one full-weight HBM pass) happens once, not per call.
    emb_p = jnp.pad(embedding.astype(jnp.bfloat16), ((0, Bp - B), (0, 0)))
    w_p = jnp.pad(weight.astype(jnp.bfloat16), ((0, Cp - C), (0, 0)))
    b_p = jnp.pad(bias.astype(jnp.float32).reshape(1, C),
                  ((0, 0), (0, Cp - C)), constant_values=_MASK_VALUE)
    tgt_p = jnp.pad(target.astype(jnp.int32).reshape(B, 1),
                    ((0, Bp - B), (0, 0)))

    kernel = functools.partial(softmax_loss_kernel,
                               num_rows=B, inv_b=1.0 / B)

    cost = pl.CostEstimate(
        flops=2 * B * D * C,
        transcendentals=B * C,
        bytes_accessed=int(nb * Cp * D * 2 + Bp * D * 2 + Cp * 4 + Bp * 8),
    )

    nll = pl.pallas_call(
        kernel,
        out_shape=jax.ShapeDtypeStruct((Bp, 1), jnp.float32),
        grid_spec=pltpu.PrefetchScalarGridSpec(
            num_scalar_prefetch=0,
            grid=(nb, nc),
            in_specs=[
                pl.BlockSpec((tm, D), lambda bi, ci: (bi, 0)),   # embedding
                pl.BlockSpec((tc, D), lambda bi, ci: (ci, 0)),   # weight (C,D)
                pl.BlockSpec((1, tc), lambda bi, ci: (0, ci)),   # bias tile
                pl.BlockSpec((tm, 1), lambda bi, ci: (bi, 0)),   # targets
            ],
            out_specs=pl.BlockSpec((tm, 1), lambda bi, ci: (bi, 0)),
            scratch_shapes=[pltpu.VMEM((tm, 1), jnp.float32)] * 3,  # m, l, t
        ),
        compiler_params=pltpu.CompilerParams(
            dimension_semantics=("parallel", "arbitrary"),
            vmem_limit_bytes=int(vmem_limit),
        ),
        cost_estimate=cost,
    )(emb_p, w_p, b_p, tgt_p)

    # Rows are pre-scaled by 1/B and padded rows are zero -> sum == mean loss.
    return jnp.sum(nll[:, 0])


def _reference_loss(embedding, weight, bias, target):
    # Same bf16 rounding of the matmul operands as the kernel, f32 math after.
    emb = embedding.astype(jnp.bfloat16).astype(jnp.float32)
    w = weight.astype(jnp.bfloat16).astype(jnp.float32)
    logits = emb @ w.T + bias.astype(jnp.float32)
    logp = jax.nn.log_softmax(logits, axis=-1)
    nll = -jnp.take_along_axis(logp, target[:, None].astype(jnp.int32), axis=-1)
    return jnp.mean(nll)


if __name__ == "__main__":
    # Small demo shapes; tm=16 / tc=128 give a 2 x 3 grid so the streaming LSE,
    # class-tile masking (C=300 -> Cp=384) and batch-row masking (B=24 -> Bp=32)
    # code paths are all exercised.  Production use: leave tm/tc as None and
    # the per-generation roofline defaults kick in.
    B, D, C = 24, 32, 300

    key = jax.random.PRNGKey(0)
    k_emb, k_w, k_b, k_t = jax.random.split(key, 4)

    embedding = jax.random.normal(k_emb, (B, D), dtype=jnp.float32)

    # Deterministic nn.Linear-style init: U(-1/sqrt(D), 1/sqrt(D))
    bound = 1.0 / jnp.sqrt(jnp.float32(D))
    weight = jax.random.uniform(k_w, (C, D), minval=-bound, maxval=bound,
                                dtype=jnp.float32)
    bias = jax.random.uniform(k_b, (C,), minval=-bound, maxval=bound,
                              dtype=jnp.float32)
    target = jax.random.randint(k_t, (B,), 0, C, dtype=jnp.int32)

    loss = softmax_loss(embedding, weight, bias, target, tm=16, tc=128)
    loss = jax.block_until_ready(loss)

    ref = _reference_loss(embedding, weight, bias, target)
    assert jnp.allclose(loss, ref, rtol=1e-4, atol=1e-4), (loss, ref)

    print("KERNEL_OK")
</pallas_src>

<mosaic_0001>
module attributes {stable_mosaic.version = 11 : i64} {
  func.func @softmax_loss_kernel(%arg0: i32, %arg1: i32, %arg2: memref<16x32xbf16, #tpu.memory_space<vmem>>, %arg3: memref<128x32xbf16, #tpu.memory_space<vmem>>, %arg4: memref<1x128xf32, #tpu.memory_space<vmem>>, %arg5: memref<16x1xi32, #tpu.memory_space<vmem>>, %arg6: memref<16x1xf32, #tpu.memory_space<vmem>>, %arg7: memref<16x1xf32, #tpu.memory_space<vmem>>, %arg8: memref<16x1xf32, #tpu.memory_space<vmem>>, %arg9: memref<16x1xf32, #tpu.memory_space<vmem>>) attributes {dimension_semantics = [#tpu.dimension_semantics<parallel>, #tpu.dimension_semantics<arbitrary>], iteration_bounds = array<i64: 2, 3>, scalar_prefetch = 0 : i64, scratch_operands = 3 : i64, tpu.core_type = #tpu.core_type<tc>, window_params = [{transform_indices = @transform_0, window_bounds = array<i64: 16, 32>}, {transform_indices = @transform_1, window_bounds = array<i64: 128, 32>}, {transform_indices = @transform_2, window_bounds = array<i64: 1, 128>}, {transform_indices = @transform_3, window_bounds = array<i64: 16, 1>}, {transform_indices = @transform_4, window_bounds = array<i64: 16, 1>}]} {
    %c0_i32 = arith.constant 0 : i32
    %0 = arith.cmpi eq, %arg1, %c0_i32 : i32
    %1 = arith.extui %0 : i1 to i32
    %c0_i32_0 = arith.constant 0 : i32
    %2 = arith.cmpi ne, %1, %c0_i32_0 : i32
    scf.if %2 {
      %cst_27 = arith.constant -1.000000e+30 : f32
      %44 = vector.broadcast %cst_27 : f32 to vector<16x1xf32>
      %c0_28 = arith.constant 0 : index
      %c0_29 = arith.constant 0 : index
      %45 = vector.load %arg7[%c0_28, %c0_29] : memref<16x1xf32, #tpu.memory_space<vmem>>, vector<16x1xf32>
      tpu.vector_store %arg7[%c0_28, %c0_29], %44 {strides = array<i32>} : memref<16x1xf32, #tpu.memory_space<vmem>>, vector<16x1xf32>,
      %cst_30 = arith.constant 0.000000e+00 : f32
      %46 = vector.broadcast %cst_30 : f32 to vector<16x1xf32>
      %c0_31 = arith.constant 0 : index
      %c0_32 = arith.constant 0 : index
      %47 = vector.load %arg8[%c0_31, %c0_32] : memref<16x1xf32, #tpu.memory_space<vmem>>, vector<16x1xf32>
      tpu.vector_store %arg8[%c0_31, %c0_32], %46 {strides = array<i32>} : memref<16x1xf32, #tpu.memory_space<vmem>>, vector<16x1xf32>,
      %cst_33 = arith.constant 0.000000e+00 : f32
      %48 = vector.broadcast %cst_33 : f32 to vector<16x1xf32>
      %c0_34 = arith.constant 0 : index
      %c0_35 = arith.constant 0 : index
      %49 = vector.load %arg9[%c0_34, %c0_35] : memref<16x1xf32, #tpu.memory_space<vmem>>, vector<16x1xf32>
      tpu.vector_store %arg9[%c0_34, %c0_35], %48 {strides = array<i32>} : memref<16x1xf32, #tpu.memory_space<vmem>>, vector<16x1xf32>,
    } else {
    }
    %c0 = arith.constant 0 : index
    %c0_1 = arith.constant 0 : index
    %3 = vector.load %arg2[%c0, %c0_1] : memref<16x32xbf16, #tpu.memory_space<vmem>>, vector<16x32xbf16>
    %c0_2 = arith.constant 0 : index
    %c0_3 = arith.constant 0 : index
    %4 = vector.load %arg3[%c0_2, %c0_3] : memref<128x32xbf16, #tpu.memory_space<vmem>>, vector<128x32xbf16>
    %cst = arith.constant dense<0.000000e+00> : vector<16x128xf32>
    %5 = tpu.matmul %3, %4, %cst {dimension_numbers = #tpu.dot_dimension_numbers<[1], [1], [0], [0], [0, 0, 1, 0], [], []>} : vector<16x32xbf16>, vector<128x32xbf16>, vector<16x128xf32> -> vector<16x128xf32>
    %c0_4 = arith.constant 0 : index
    %c0_5 = arith.constant 0 : index
    %6 = vector.load %arg4[%c0_4, %c0_5] : memref<1x128xf32, #tpu.memory_space<vmem>>, vector<1x128xf32>
    %7 = vector.broadcast %6 : vector<1x128xf32> to vector<16x128xf32>
    %8 = arith.addf %5, %7 : vector<16x128xf32>
    %cst_6 = arith.constant dense<0xFF800000> : vector<16xf32>
    %9 = vector.multi_reduction <maximumf>, %8, %cst_6 [1] : vector<16x128xf32> to vector<16xf32>
    %10 = vector.shape_cast %9 : vector<16xf32> to vector<16x1xf32>
    %c0_7 = arith.constant 0 : index
    %c0_8 = arith.constant 0 : index
    %11 = vector.load %arg7[%c0_7, %c0_8] : memref<16x1xf32, #tpu.memory_space<vmem>>, vector<16x1xf32>
    %12 = arith.maximumf %11, %10 : vector<16x1xf32>
    %c0_9 = arith.constant 0 : index
    %c0_10 = arith.constant 0 : index
    %13 = vector.load %arg7[%c0_9, %c0_10] : memref<16x1xf32, #tpu.memory_space<vmem>>, vector<16x1xf32>
    %14 = arith.subf %13, %12 : vector<16x1xf32>
    %15 = math.exp %14 : vector<16x1xf32>
    %16 = vector.broadcast %12 : vector<16x1xf32> to vector<16x128xf32>
    %17 = arith.subf %8, %16 : vector<16x128xf32>
    %18 = math.exp %17 : vector<16x128xf32>
    %c0_11 = arith.constant 0 : index
    %c0_12 = arith.constant 0 : index
    %19 = vector.load %arg8[%c0_11, %c0_12] : memref<16x1xf32, #tpu.memory_space<vmem>>, vector<16x1xf32>
    %20 = arith.mulf %15, %19 : vector<16x1xf32>
    %cst_13 = arith.constant dense<0.000000e+00> : vector<16xf32>
    %21 = vector.multi_reduction <add>, %18, %cst_13 [1] : vector<16x128xf32> to vector<16xf32>
    %22 = vector.shape_cast %21 : vector<16xf32> to vector<16x1xf32>
    %23 = arith.addf %20, %22 : vector<16x1xf32>
    %c0_14 = arith.constant 0 : index
    %c0_15 = arith.constant 0 : index
    %24 = vector.load %arg8[%c0_14, %c0_15] : memref<16x1xf32, #tpu.memory_space<vmem>>, vector<16x1xf32>
    tpu.vector_store %arg8[%c0_14, %c0_15], %23 {strides = array<i32>} : memref<16x1xf32, #tpu.memory_space<vmem>>, vector<16x1xf32>,
    %c0_16 = arith.constant 0 : index
    %c0_17 = arith.constant 0 : index
    %25 = vector.load %arg7[%c0_16, %c0_17] : memref<16x1xf32, #tpu.memory_space<vmem>>, vector<16x1xf32>
    tpu.vector_store %arg7[%c0_16, %c0_17], %12 {strides = array<i32>} : memref<16x1xf32, #tpu.memory_space<vmem>>, vector<16x1xf32>,
    %c128_i32 = arith.constant 128 : i32
    %26 = arith.muli %arg1, %c128_i32 : i32
    %27 = tpu.iota {dimensions = array<i32: 1>} : vector<1x128xi32>
    %28 = vector.broadcast %26 : i32 to vector<1x128xi32>
    %29 = arith.addi %28, %27 : vector<1x128xi32>
    %c0_18 = arith.constant 0 : index
    %c0_19 = arith.constant 0 : index
    %30 = vector.load %arg5[%c0_18, %c0_19] : memref<16x1xi32, #tpu.memory_space<vmem>>, vector<16x1xi32>
    %31 = vector.broadcast %29 : vector<1x128xi32> to vector<16x128xi32>
    %32 = vector.broadcast %30 : vector<16x1xi32> to vector<16x128xi32>
    %33 = arith.cmpi eq, %31, %32 : vector<16x128xi32>
    %c0_20 = arith.constant 0 : index
    %c0_21 = arith.constant 0 : index
    %34 = vector.load %arg9[%c0_20, %c0_21] : memref<16x1xf32, #tpu.memory_space<vmem>>, vector<16x1xf32>
    %cst_22 = arith.constant 0.000000e+00 : f32
    %35 = vector.broadcast %cst_22 : f32 to vector<16x128xf32>
    %36 = arith.select %33, %8, %35 : vector<16x128xi1>, vector<16x128xf32>
    %cst_23 = arith.constant dense<0.000000e+00> : vector<16xf32>
    %37 = vector.multi_reduction <add>, %36, %cst_23 [1] : vector<16x128xf32> to vector<16xf32>
    %38 = vector.shape_cast %37 : vector<16xf32> to vector<16x1xf32>
    %39 = arith.addf %34, %38 : vector<16x1xf32>
    %c0_24 = arith.constant 0 : index
    %c0_25 = arith.constant 0 : index
    %40 = vector.load %arg9[%c0_24, %c0_25] : memref<16x1xf32, #tpu.memory_space<vmem>>, vector<16x1xf32>
    tpu.vector_store %arg9[%c0_24, %c0_25], %39 {strides = array<i32>} : memref<16x1xf32, #tpu.memory_space<vmem>>, vector<16x1xf32>,
    %c2_i32 = arith.constant 2 : i32
    %41 = arith.cmpi eq, %arg1, %c2_i32 : i32
    %42 = arith.extui %41 : i1 to i32
    %c0_i32_26 = arith.constant 0 : i32
    %43 = arith.cmpi ne, %42, %c0_i32_26 : i32
    scf.if %43 {
      %c0_27 = arith.constant 0 : index
      %c0_28 = arith.constant 0 : index
      %44 = vector.load %arg7[%c0_27, %c0_28] : memref<16x1xf32, #tpu.memory_space<vmem>>, vector<16x1xf32>
      %c0_29 = arith.constant 0 : index
      %c0_30 = arith.constant 0 : index
      %45 = vector.load %arg8[%c0_29, %c0_30] : memref<16x1xf32, #tpu.memory_space<vmem>>, vector<16x1xf32>
      %46 = math.log %45 : vector<16x1xf32>
      %47 = arith.addf %44, %46 : vector<16x1xf32>
      %c0_31 = arith.constant 0 : index
      %c0_32 = arith.constant 0 : index
      %48 = vector.load %arg9[%c0_31, %c0_32] : memref<16x1xf32, #tpu.memory_space<vmem>>, vector<16x1xf32>
      %49 = arith.subf %47, %48 : vector<16x1xf32>
      %c16_i32 = arith.constant 16 : i32
      %50 = arith.muli %arg0, %c16_i32 : i32
      %51 = tpu.iota {dimensions = array<i32: 0>} : vector<16x1xi32>
      %52 = vector.broadcast %50 : i32 to vector<16x1xi32>
      %53 = arith.addi %52, %51 : vector<16x1xi32>
      %c24_i32 = arith.constant 24 : i32
      %54 = vector.broadcast %c24_i32 : i32 to vector<16x1xi32>
      %55 = arith.cmpi slt, %53, %54 : vector<16x1xi32>
      %cst_33 = arith.constant 0.000000e+00 : f32
      %56 = vector.broadcast %cst_33 : f32 to vector<16x1xf32>
      %57 = arith.select %55, %49, %56 : vector<16x1xi1>, vector<16x1xf32>
      %cst_34 = arith.constant 0.0416666679 : f32
      %58 = vector.broadcast %cst_34 : f32 to vector<16x1xf32>
      %59 = arith.mulf %57, %58 : vector<16x1xf32>
      %c0_35 = arith.constant 0 : index
      %c0_36 = arith.constant 0 : index
      %60 = vector.load %arg6[%c0_35, %c0_36] : memref<16x1xf32, #tpu.memory_space<vmem>>, vector<16x1xf32>
      tpu.vector_store %arg6[%c0_35, %c0_36], %59 {strides = array<i32>} : memref<16x1xf32, #tpu.memory_space<vmem>>, vector<16x1xf32>,
    } else {
    }
    return
  }
  func.func @transform_0(%arg0: i32, %arg1: i32) -> (i32, i32) {
    %c0_i32 = arith.constant 0 : i32
    %c0_i32_0 = arith.constant 0 : i32
    return %arg0, %c0_i32 : i32, i32
  }
  func.func @transform_1(%arg0: i32, %arg1: i32) -> (i32, i32) {
    %c0_i32 = arith.constant 0 : i32
    %c0_i32_0 = arith.constant 0 : i32
    return %arg1, %c0_i32 : i32, i32
  }
  func.func @transform_2(%arg0: i32, %arg1: i32) -> (i32, i32) {
    %c0_i32 = arith.constant 0 : i32
    %c0_i32_0 = arith.constant 0 : i32
    return %c0_i32, %arg1 : i32, i32
  }
  func.func @transform_3(%arg0: i32, %arg1: i32) -> (i32, i32) {
    %c0_i32 = arith.constant 0 : i32
    %c0_i32_0 = arith.constant 0 : i32
    return %arg0, %c0_i32 : i32, i32
  }
  func.func @transform_4(%arg0: i32, %arg1: i32) -> (i32, i32) {
    %c0_i32 = arith.constant 0 : i32
    %c0_i32_0 = arith.constant 0 : i32
    return %arg0, %c0_i32 : i32, i32
  }
}

</mosaic_0001>

<llo_original>
// kernel: softmax_loss.1
$region0: #{softmax_loss.1}
  #allocation0 [shape = 'u32[]', space=smem, size = 0x4, offset = 0x4, fixed_abs, tag = 'smem constant byte address 0x4 - core index']
  #allocation1 [shape = 'u32[72,128]{1,0:T(1,128)}', space=vmem, size = 0x9000, scoped, tag = 'internal scratch']
  #allocation2 [shape = 'f32[16,1]{1,0:T(8,128)}', space=vmem, size = 0x2000, scoped, tag = 'scratch operand']
  #allocation3 [shape = 'f32[16,1]{1,0:T(8,128)}', space=vmem, size = 0x2000, scoped, tag = 'scratch operand']
  #allocation4 [shape = 'f32[16,1]{1,0:T(8,128)}', space=vmem, size = 0x2000, scoped, tag = 'scratch operand']
  %s0 = inlined_call_operand.vmem [shape: bf16[32,32], index: 0, kind: input, shape index: {}]
  %s1 = inlined_call_operand.vmem [shape: bf16[384,32], index: 1, kind: input, shape index: {}]
  %s2 = inlined_call_operand.vmem [shape: f32[1,384], index: 2, kind: input, shape index: {}]
  %s3 = inlined_call_operand.vmem [shape: s32[32,1], index: 3, kind: input, shape index: {}]
  %s4 = inlined_call_operand.vmem [shape: f32[32,1], index: 4, kind: output, shape index: {}]
  %s5 = sld [smem:[#allocation0]]
  $region57: #{softmax_loss.1} parent=0
    _
  %s7 = ssub.s32 1, %s5
  %s8 = scalar_select 0, %s7, %s5
  loop: start=0, step=1, limit=8
  $region2: #{softmax_loss.1} parent=0 // loop_pre_header
    _
  $region3: #{softmax_loss.1} parent=0 // loop_header
    %s10 = sphi 0, %s14
    %p11 = scmp.ge.s32.totalorder %s10, 8
    %s17 = sphi 0, %s29
    %s18 = sphi 0, %s25
    %s19 = sphi 0, %s17
    %s20 = sphi 0, %s18
    %s21 = sphi 0, %s19
    %s22 = sphi 0, %s20
    %s32 = sphi 0, %s34
    %s35 = sphi 0, %s32
    %s36 = sphi 0, %s35
    %s52 = sphi 0, %s36
    %s58 = sphi 0, %s60
    %s61 = sphi 0, %s58
    %s62 = sphi 0, %s61
    %s78 = sphi 0, %s62
    %s84 = sphi 0, %s86
    %s87 = sphi 0, %s84
    %s88 = sphi 0, %s87
    %s104 = sphi 0, %s88
    %s110 = sphi 0, %s112
    %s113 = sphi 0, %s110
    %s114 = sphi 0, %s113
    %s130 = sphi 0, %s114
    %s136 = sphi 0, %s138
    %s139 = sphi 0, %s136
    %s140 = sphi 0, %s139
    %s156 = sphi 0, %s140
  $region4: #{softmax_loss.1} parent=0 // loop_header_branch
    %13 = sbr.rel (%p11) target = $region8
  $region5: #{softmax_loss.1} parent=0 // loop_body
    %s15 = ssub.s32 %s10, 1
    %s16 = ssub.s32 %s10, 2
    %s23 = sadd.s32 1, %s18
    %p24 = scmp.ge.s32.totalorder %s23, 3
    %s25 = scalar_select %p24, 0, %s23
    %s26 = sadd.s32 1, %s17
    %s27 = scalar_select %p24, %s26, %s17
    %p28 = scmp.ge.s32.totalorder %s27, 2
    %s29 = scalar_select %p28, 0, %s27
    %s30 = ssub.s32 %s17, %s29
    %p31 = scmp.eq.s32.totalorder %s30, 0
    %s33 = sadd.s32 %s32, 1
    %s34 = scalar_select %p31, %s32, %s33
    %p37 = pneg %p31
    %p38 = scmp.eq.s32.totalorder %s10, 5
    %p39 = por %p37, %p38
    %p40 = scmp.ne.s32.totalorder %s32, %s35
    %p41 = scmp.eq.s32.totalorder %s10, 0
    %p42 = por %p40, %p41
    %p43 = scmp.ne.s32.totalorder %s32, %s35
    %p44 = scmp.eq.s32.totalorder %s15, 5
    %p45 = por %p43, %p44
    %p46 = scmp.ne.s32.totalorder %s35, %s36
    %p47 = scmp.eq.s32.totalorder %s15, 0
    %p48 = por %p46, %p47
    %p49 = scmp.ne.s32.totalorder %s35, %s36
    %p50 = scmp.eq.s32.totalorder %s16, 5
    %p51 = por %p49, %p50
    %p53 = scmp.ne.s32.totalorder %s36, %s52
    %p54 = scmp.eq.s32.totalorder %s16, 0
    %p55 = por %p53, %p54
    %s56 = ssub.s32 %s18, %s25
    %p57 = scmp.eq.s32.totalorder %s56, 0
    %s59 = sadd.s32 %s58, 1
    %s60 = scalar_select %p57, %s58, %s59
    %p63 = pneg %p57
    %p64 = scmp.eq.s32.totalorder %s10, 5
    %p65 = por %p63, %p64
    %p66 = scmp.ne.s32.totalorder %s58, %s61
    %p67 = scmp.eq.s32.totalorder %s10, 0
    %p68 = por %p66, %p67
    %p69 = scmp.ne.s32.totalorder %s58, %s61
    %p70 = scmp.eq.s32.totalorder %s15, 5
    %p71 = por %p69, %p70
    %p72 = scmp.ne.s32.totalorder %s61, %s62
    %p73 = scmp.eq.s32.totalorder %s15, 0
    %p74 = por %p72, %p73
    %p75 = scmp.ne.s32.totalorder %s61, %s62
    %p76 = scmp.eq.s32.totalorder %s16, 5
    %p77 = por %p75, %p76
    %p79 = scmp.ne.s32.totalorder %s62, %s78
    %p80 = scmp.eq.s32.totalorder %s16, 0
    %p81 = por %p79, %p80
    %s82 = ssub.s32 %s18, %s25
    %p83 = scmp.eq.s32.totalorder %s82, 0
    %s85 = sadd.s32 %s84, 1
    %s86 = scalar_select %p83, %s84, %s85
    %p89 = pneg %p83
    %p90 = scmp.eq.s32.totalorder %s10, 5
    %p91 = por %p89, %p90
    %p92 = scmp.ne.s32.totalorder %s84, %s87
    %p93 = scmp.eq.s32.totalorder %s10, 0
    %p94 = por %p92, %p93
    %p95 = scmp.ne.s32.totalorder %s84, %s87
    %p96 = scmp.eq.s32.totalorder %s15, 5
    %p97 = por %p95, %p96
    %p98 = scmp.ne.s32.totalorder %s87, %s88
    %p99 = scmp.eq.s32.totalorder %s15, 0
    %p100 = por %p98, %p99
    %p101 = scmp.ne.s32.totalorder %s87, %s88
    %p102 = scmp.eq.s32.totalorder %s16, 5
    %p103 = por %p101, %p102
    %p105 = scmp.ne.s32.totalorder %s88, %s104
    %p106 = scmp.eq.s32.totalorder %s16, 0
    %p107 = por %p105, %p106
    %s108 = ssub.s32 %s17, %s29
    %p109 = scmp.eq.s32.totalorder %s108, 0
    %s111 = sadd.s32 %s110, 1
    %s112 = scalar_select %p109, %s110, %s111
    %p115 = pneg %p109
    %p116 = scmp.eq.s32.totalorder %s10, 5
    %p117 = por %p115, %p116
    %p118 = scmp.ne.s32.totalorder %s110, %s113
    %p119 = scmp.eq.s32.totalorder %s10, 0
    %p120 = por %p118, %p119
    %p121 = scmp.ne.s32.totalorder %s110, %s113
    %p122 = scmp.eq.s32.totalorder %s15, 5
    %p123 = por %p121, %p122
    %p124 = scmp.ne.s32.totalorder %s113, %s114
    %p125 = scmp.eq.s32.totalorder %s15, 0
    %p126 = por %p124, %p125
    %p127 = scmp.ne.s32.totalorder %s113, %s114
    %p128 = scmp.eq.s32.totalorder %s16, 5
    %p129 = por %p127, %p128
    %p131 = scmp.ne.s32.totalorder %s114, %s130
    %p132 = scmp.eq.s32.totalorder %s16, 0
    %p133 = por %p131, %p132
    %s134 = ssub.s32 %s17, %s29
    %p135 = scmp.eq.s32.totalorder %s134, 0
    %s137 = sadd.s32 %s136, 1
    %s138 = scalar_select %p135, %s136, %s137
    %p141 = pneg %p135
    %p142 = scmp.eq.s32.totalorder %s10, 5
    %p143 = por %p141, %p142
    %p144 = scmp.ne.s32.totalorder %s136, %s139
    %p145 = scmp.eq.s32.totalorder %s10, 0
    %p146 = por %p144, %p145
    %p147 = scmp.ne.s32.totalorder %s136, %s139
    %p148 = scmp.eq.s32.totalorder %s15, 5
    %p149 = por %p147, %p148
    %p150 = scmp.ne.s32.totalorder %s139, %s140
    %p151 = scmp.eq.s32.totalorder %s15, 0
    %p152 = por %p150, %p151
    %p153 = scmp.ne.s32.totalorder %s139, %s140
    %p154 = scmp.eq.s32.totalorder %s16, 5
    %p155 = por %p153, %p154
    %p157 = scmp.ne.s32.totalorder %s140, %s156
    %p158 = scmp.eq.s32.totalorder %s16, 0
    %p159 = por %p157, %p158
    %p160 = scmp.le.s32.totalorder 1, %s10
    %p161 = scmp.lt.s32.totalorder %s10, 7
    %p162 = pnand %p160, %p161
    %p163 = pneg %p162
    // Predicated region
    $region9: #{softmax_loss.1} parent=5 // pred_check
      _
    $region10: #{softmax_loss.1} parent=5 // pred_check_branch
      %165 = sbr.rel (%p162) target = $region12
    $region11: #{softmax_loss.1} parent=5 // pred_region
      %s166 = ssub.s32 %s10, 1
    $region12: #{softmax_loss.1} parent=5 // pred_fallthru
      _
    %p167 = scmp.lt.s32.totalorder %s10, 6
    // Predicated region
    $region13: #{softmax_loss.1} parent=5 // pred_check
      %p168 = pneg %p167
    $region14: #{softmax_loss.1} parent=5 // pred_check_branch
      %170 = sbr.rel (%p168) target = $region16
    $region15: #{softmax_loss.1} parent=5 // pred_region
      // Predicated region
      $region17: #{softmax_loss.1} parent=15 // pred_check
        %p171 = pneg %p42
      $region18: #{softmax_loss.1} parent=15 // pred_check_branch
        %173 = sbr.rel (%p171) target = $region20
      $region19: #{softmax_loss.1} parent=15 // pred_region
        %s174 = smul.u32 2, %s17
        %p175 = scmp.lt.s32.totalorder %s174, 3
        %s176 = scalar_select %p175, %s174, 3
        %s177 = smul.addr %s176, 4
        %s178 = scalar_lea.vmem %s0, %s177
        %s179 = smul.u32 2, %s17
      $region20: #{softmax_loss.1} parent=15 // pred_fallthru
        _
      // Predicated region
      $region21: #{softmax_loss.1} parent=15 // pred_check
        %p180 = pneg %p68
      $region22: #{softmax_loss.1} parent=15 // pred_check_branch
        %182 = sbr.rel (%p180) target = $region24
      $region23: #{softmax_loss.1} parent=15 // pred_region
        %s183 = smul.u32 16, %s18
        %p184 = scmp.lt.s32.totalorder %s183, 47
        %s185 = scalar_select %p184, %s183, 47
        %s186 = smul.addr %s185, 4
        %s187 = scalar_lea.vmem %s1, %s186
        %s188 = smul.u32 16, %s18
      $region24: #{softmax_loss.1} parent=15 // pred_fallthru
        _
      // Predicated region
      $region25: #{softmax_loss.1} parent=15 // pred_check
        %p189 = pneg %p94
      $region26: #{softmax_loss.1} parent=15 // pred_check_branch
        %191 = sbr.rel (%p189) target = $region28
      $region27: #{softmax_loss.1} parent=15 // pred_region
        %p192 = scmp.lt.s32.totalorder %s18, 2
        %s193 = scalar_select %p192, %s18, 2
        %s194 = scalar_lea.vmem %s2, %s193
      $region28: #{softmax_loss.1} parent=15 // pred_fallthru
        _
      // Predicated region
      $region29: #{softmax_loss.1} parent=15 // pred_check
        %p195 = pneg %p120
      $region30: #{softmax_loss.1} parent=15 // pred_check_branch
        %197 = sbr.rel (%p195) target = $region32
      $region31: #{softmax_loss.1} parent=15 // pred_region
        %s198 = smul.u32 2, %s17
        %p199 = scmp.lt.s32.totalorder %s198, 3
        %s200 = scalar_select %p199, %s198, 3
        %s201 = smul.addr %s200, 8
        %s202 = scalar_lea.vmem %s3, %s201
        %s203 = smul.u32 2, %s17
      $region32: #{softmax_loss.1} parent=15 // pred_fallthru
        _
    $region16: #{softmax_loss.1} parent=5 // pred_fallthru
      _
    %p204 = scmp.le.s32.totalorder 1, %s10
    %p205 = scmp.lt.s32.totalorder %s10, 7
    %p206 = pnand %p204, %p205
    %p207 = pneg %p206
    // Predicated region
    $region33: #{softmax_loss.1} parent=5 // pred_check
      _
    $region34: #{softmax_loss.1} parent=5 // pred_check_branch
      %209 = sbr.rel (%p206) target = $region36
    $region35: #{softmax_loss.1} parent=5 // pred_region
      %s210 = ssub.s32 %s10, 1
      %s211 = smul.u32 2, %s19
      %p212 = scmp.lt.s32.totalorder %s211, 3
      %s213 = scalar_select %p212, %s211, 3
      %s214 = smul.addr %s213, 4
      %s215 = scalar_lea.vmem %s0, %s214
      %p216 = pneg %p48
      %p217 = pneg %p45
      %s218 = smul.u32 16, %s20
      %p219 = scmp.lt.s32.totalorder %s218, 47
      %s220 = scalar_select %p219, %s218, 47
      %s221 = smul.addr %s220, 4
      %s222 = scalar_lea.vmem %s1, %s221
      %p223 = pneg %p74
      %p224 = pneg %p71
      %p225 = scmp.lt.s32.totalorder %s20, 2
      %s226 = scalar_select %p225, %s20, 2
      %s227 = scalar_lea.vmem %s2, %s226
      %p228 = pneg %p100
      %p229 = pneg %p97
      %s230 = smul.u32 2, %s19
      %p231 = scmp.lt.s32.totalorder %s230, 3
      %s232 = scalar_select %p231, %s230, 3
      %s233 = smul.addr %s232, 8
      %s234 = scalar_lea.vmem %s3, %s233
      %p235 = pneg %p126
      %p236 = pneg %p123
      %p237 = pneg %p152
      %p238 = pneg %p149
      %s239 = smul.u32 2, %s19
      %p240 = scmp.lt.s32.totalorder %s239, 3
      %s241 = scalar_select %p240, %s239, 3
      %s242 = smul.addr %s241, 8
      %s243 = scalar_lea.vmem %s4, %s242
      %s244 = smul.u32 2, %s19
      %p245 = scmp.lt.s32.totalorder %s244, 3
      %s246 = scalar_select %p245, %s244, 3
      %s247 = smul.addr %s246, 4
      %s248 = scalar_lea.vmem %s0, %s247
      %s249 = smul.u32 2, %s19
      %s250 = smul.u32 16, %s20
      %p251 = scmp.lt.s32.totalorder %s250, 47
      %s252 = scalar_select %p251, %s250, 47
      %s253 = smul.addr %s252, 4
      %s254 = scalar_lea.vmem %s1, %s253
      %s255 = smul.u32 16, %s20
      %p256 = scmp.lt.s32.totalorder %s20, 2
      %s257 = scalar_select %p256, %s20, 2
      %s258 = scalar_lea.vmem %s2, %s257
      %s259 = smul.u32 2, %s19
      %p260 = scmp.lt.s32.totalorder %s259, 3
      %s261 = scalar_select %p260, %s259, 3
      %s262 = smul.addr %s261, 8
      %s263 = scalar_lea.vmem %s3, %s262
      %s264 = smul.u32 2, %s19
      %s265 = smul.u32 2, %s19
      %p266 = scmp.lt.s32.totalorder %s265, 3
      %s267 = scalar_select %p266, %s265, 3
      %s268 = smul.addr %s267, 8
      %s269 = scalar_lea.vmem %s4, %s268
      %s270 = smul.u32 2, %s19
      %p271 = scmp.eq.s32.totalorder %s20, 0
      // Predicated region
      $region37: #{softmax_loss.1} parent=35 // pred_check
        %p272 = pneg %p271
      $region38: #{softmax_loss.1} parent=35 // pred_check_branch
        %274 = sbr.rel (%p272) target = $region40
      $region39: #{softmax_loss.1} parent=35 // pred_region
        %vm275 = vcmask 7168
        %276 = vst.msk [vmem:[#allocation2] sm:$0xff] %vm275, -1e+30
        %277 = vst.msk [vmem:[#allocation2 + $0x8] sm:$0xff] %vm275, -1e+30
        %278 = vst.msk [vmem:[#allocation3] sm:$0xff] %vm275, 0.0
        %279 = vst.msk [vmem:[#allocation3 + $0x8] sm:$0xff] %vm275, 0.0
        %280 = vst.msk [vmem:[#allocation4] sm:$0xff] %vm275, 0.0
        %281 = vst.msk [vmem:[#allocation4 + $0x8] sm:$0xff] %vm275, 0.0
      $region40: #{softmax_loss.1} parent=35 // pred_fallthru
        _
      %v282 = vld [vmem:[%s248] sm:$0xf]
      %v283 = vld [vmem:[%s248 + $0x4] sm:$0xf]
      %v284 = vld [vmem:[%s254] sm:$0xf]
      %v285 = vld [vmem:[%s254 + $0x4] sm:$0xf]
      %v286 = vld [vmem:[%s254 + $0x8] sm:$0xf]
      %v287 = vld [vmem:[%s254 + $0xc] sm:$0xf]
      %v288 = vld [vmem:[%s254 + $0x10] sm:$0xf]
      %v289 = vld [vmem:[%s254 + $0x14] sm:$0xf]
      %v290 = vld [vmem:[%s254 + $0x18] sm:$0xf]
      %v291 = vld [vmem:[%s254 + $0x1c] sm:$0xf]
      %v292 = vld [vmem:[%s254 + $0x20] sm:$0xf]
      %v293 = vld [vmem:[%s254 + $0x24] sm:$0xf]
      %v294 = vld [vmem:[%s254 + $0x28] sm:$0xf]
      %v295 = vld [vmem:[%s254 + $0x2c] sm:$0xf]
      %v296 = vld [vmem:[%s254 + $0x30] sm:$0xf]
      %v297 = vld [vmem:[%s254 + $0x34] sm:$0xf]
      %v298 = vld [vmem:[%s254 + $0x38] sm:$0xf]
      %v299 = vld [vmem:[%s254 + $0x3c] sm:$0xf]
      %v300 = vld [vmem:[%s258] sm:$0x1]
      %v302 = vperm.slane %v300, 0
      %v306 = vunpack.c.l.b16 %v282
      %v307 = vunpack.c.l.b16 %v283
      %v308 = vpack.c.b16 %v307, %v306
      %v325 = vunpack.c.l.b16 %v284
      %v326 = vunpack.c.l.b16 %v285
      %v327 = vunpack.c.l.b16 %v286
      %v328 = vunpack.c.l.b16 %v287
      %v329 = vunpack.c.l.b16 %v288
      %v330 = vunpack.c.l.b16 %v289
      %v331 = vunpack.c.l.b16 %v290
      %v332 = vunpack.c.l.b16 %v291
      %v333 = vunpack.c.l.b16 %v292
      %v334 = vunpack.c.l.b16 %v293
      %v335 = vunpack.c.l.b16 %v294
      %v336 = vunpack.c.l.b16 %v295
      %v337 = vunpack.c.l.b16 %v296
      %v338 = vunpack.c.l.b16 %v297
      %v339 = vunpack.c.l.b16 %v298
      %v340 = vunpack.c.l.b16 %v299
      %v341 = vpack.c.b16 %v326, %v325
      %v342 = vpack.c.b16 %v328, %v327
      %v343 = vpack.c.b16 %v330, %v329
      %v344 = vpack.c.b16 %v332, %v331
      %v345 = vpack.c.b16 %v334, %v333
      %v346 = vpack.c.b16 %v336, %v335
      %v347 = vpack.c.b16 %v338, %v337
      %v348 = vpack.c.b16 %v340, %v339
      %vm349 = vcmask 261120
      %v351 = vsel %vm349, %v308, 0
      %v354 = vsel %vm349, %v341, 0
      %v357 = vsel %vm349, %v342, 0
      %v360 = vsel %vm349, %v343, 0
      %v363 = vsel %vm349, %v344, 0
      %v366 = vsel %vm349, %v345, 0
      %v369 = vsel %vm349, %v346, 0
      %v372 = vsel %vm349, %v347, 0
      %v375 = vsel %vm349, %v348, 0
      %377 = vmatpush.bf16.xpose.msra.mxu0 %v375
      %378 = vmatpush.bf16.xpose.msra.mxu0 %v372
      %379 = vmatpush.bf16.xpose.msra.mxu0 %v369
      %380 = vmatpush.bf16.xpose.msra.mxu0 %v366
      %381 = vmatpush.bf16.xpose.msra.mxu0 %v363
      %382 = vmatpush.bf16.xpose.msra.mxu0 %v360
      %383 = vmatpush.bf16.xpose.msra.mxu0 %v357
      %384 = vmatpush.bf16.xpose.msra.mxu0 %v354
      %385 = vmatmul.bf16.gmra.mxu0 %v351
      %v386 = vpop.f32.mrf.mxu0
      %v387 = vadd.f32 %v302, %v386
      %v388 = vpop.f32.mrf.mxu0
      %v389 = vadd.f32 %v302, %v388
      %390 = vdwg.mxu0
      %391 = vmax.xlane.f32.xlu0 %v387
      %v392 = vpop.xlane.xlu0 %391
      %393 = vmax.xlane.f32.xlu0 %v389
      %v394 = vpop.xlane.xlu0 %393
      %v395 = vld [vmem:[#allocation2] sm:$0xff]
      %v396 = vld [vmem:[#allocation2 + $0x8] sm:$0xff]
      %v397 = vmax.f32 %v395, %v392
      %v398 = vmax.f32 %v396, %v394
      %v399 = vsub.f32 %v395, %v397
      %v400 = vsub.f32 %v396, %v398
      %v401 = vmul.f32 %v399, 1.442695
      %v402 = vpow.pop %v401
      %v403 = vmul.f32 %v400, 1.442695
      %v404 = vpow.pop %v403
      %406 = vset.pattern.permute.xlu0 0
      %407 = vperm.xlu0 %406, %v397
      %v408 = vpop.permute.xlu0 %407
      %411 = vset.pattern.permute.xlu0 0
      %412 = vperm.xlu0 %411, %v398
      %v413 = vpop.permute.xlu0 %412
      %v415 = vsub.f32 %v387, %v408
      %v416 = vsub.f32 %v389, %v413
      %v417 = vmul.f32 %v415, 1.442695
      %v418 = vpow.pop %v417
      %v419 = vmul.f32 %v416, 1.442695
      %v420 = vpow.pop %v419
      %v421 = vld [vmem:[#allocation3] sm:$0xff]
      %v422 = vld [vmem:[#allocation3 + $0x8] sm:$0xff]
      %v423 = vmul.f32 %v402, %v421
      %v424 = vmul.f32 %v404, %v422
      %425 = vadd.xlane.f32.xlu0 %v418
      %v426 = vpop.xlane.xlu0 %425
      %427 = vadd.xlane.f32.xlu0 %v420
      %v428 = vpop.xlane.xlu0 %427
      %v429 = vadd.f32 %v423, %v426
      %v430 = vadd.f32 %v424, %v428
      %vm431 = vcmask 7168
      %432 = vst.msk [vmem:[#allocation3] sm:$0xff] %vm431, %v429
      %433 = vst.msk [vmem:[#allocation3 + $0x8] sm:$0xff] %vm431, %v430
      %434 = vst.msk [vmem:[#allocation2] sm:$0xff] %vm431, %v397
      %435 = vst.msk [vmem:[#allocation2 + $0x8] sm:$0xff] %vm431, %v398
      %s436 = smul.u32 %s20, 128
      %v437 = vlaneseq
      %v438 = vand.u32 %v437, 127
      %v439 = vstv %s436
      %v440 = vadd.s32 %v439, %v438
      %v441 = vld [vmem:[%s263] sm:$0xff]
      %v442 = vld [vmem:[%s263 + $0x8] sm:$0xff]
      %443 = vset.pattern.permute.xlu0 0
      %444 = vperm.xlu0 %443, %v441
      %v445 = vpop.permute.xlu0 %444
      %446 = vset.pattern.permute.xlu0 0
      %447 = vperm.xlu0 %446, %v442
      %v448 = vpop.permute.xlu0 %447
      %vm449 = vcmp.eq.s32.totalorder %v440, %v445
      %vm450 = vcmp.eq.s32.totalorder %v440, %v448
      %v451 = vld [vmem:[#allocation4] sm:$0xff]
      %v452 = vld [vmem:[#allocation4 + $0x8] sm:$0xff]
      %v453 = vsel %vm449, %v387, 0.0
      %v454 = vsel %vm450, %v389, 0.0
      %455 = vadd.xlane.f32.xlu0 %v453
      %v456 = vpop.xlane.xlu0 %455
      %457 = vadd.xlane.f32.xlu0 %v454
      %v458 = vpop.xlane.xlu0 %457
      %v459 = vadd.f32 %v451, %v456
      %v460 = vadd.f32 %v452, %v458
      %461 = vst.msk [vmem:[#allocation4] sm:$0xff] %vm431, %v459
      %462 = vst.msk [vmem:[#allocation4 + $0x8] sm:$0xff] %vm431, %v460
      %p463 = scmp.eq.s32.totalorder %s20, 2
      // Predicated region
      $region41: #{softmax_loss.1} parent=35 // pred_check
        %p464 = pneg %p463
      $region42: #{softmax_loss.1} parent=35 // pred_check_branch
        %466 = sbr.rel (%p464) target = $region44
      $region43: #{softmax_loss.1} parent=35 // pred_region
        %v467 = vld [vmem:[#allocation2] sm:$0xff]
        %v468 = vld [vmem:[#allocation2 + $0x8] sm:$0xff]
        %v469 = vld [vmem:[#allocation3] sm:$0xff]
        %v470 = vld [vmem:[#allocation3 + $0x8] sm:$0xff]
        %v471 = vlog2.pop %v469
        %v472 = vmul.f32 %v471, 0.6931472
        %v473 = vlog2.pop %v470
        %v474 = vmul.f32 %v473, 0.6931472
        %v475 = vadd.f32 %v467, %v472
        %v476 = vadd.f32 %v468, %v474
        %v477 = vld [vmem:[#allocation4] sm:$0xff]
        %v478 = vld [vmem:[#allocation4 + $0x8] sm:$0xff]
        %v479 = vsub.f32 %v475, %v477
        %v480 = vsub.f32 %v476, %v478
        %s481 = smul.u32 %s19, 16
        %v482 = vlaneseq
        %v483 = vshrl.u32 %v482, 7
        %v484 = vadd.s32 %v483, 8
        %v485 = vstv %s481
        %v486 = vadd.s32 %v485, %v483
        %v487 = vadd.s32 %v485, %v484
        %vm488 = vcmp.lt.s32.totalorder %v486, 24
        %vm489 = vcmp.lt.s32.totalorder %v487, 24
        %v490 = vsel %vm488, %v479, 0.0
        %v491 = vsel %vm489, %v480, 0.0
        %v492 = vmul.f32 %v490, 0.041666668
        %v493 = vmul.f32 %v491, 0.041666668
        %494 = vst.msk [vmem:[%s269] sm:$0xff] %vm431, %v492
        %495 = vst.msk [vmem:[%s269 + $0x8] sm:$0xff] %vm431, %v493
      $region44: #{softmax_loss.1} parent=35 // pred_fallthru
        _
      %s496 = smul.u32 2, %s19
      %p497 = scmp.lt.s32.totalorder %s496, 3
      %s498 = scalar_select %p497, %s496, 3
      %s499 = smul.addr %s498, 8
      %s500 = scalar_lea.vmem %s4, %s499
      // Predicated region
      $region45: #{softmax_loss.1} parent=35 // pred_check
        %p501 = pneg %p149
      $region46: #{softmax_loss.1} parent=35 // pred_check_branch
        %503 = sbr.rel (%p501) target = $region48
      $region47: #{softmax_loss.1} parent=35 // pred_region
        %s504 = smul.u32 2, %s19
      $region48: #{softmax_loss.1} parent=35 // pred_fallthru
        _
    $region36: #{softmax_loss.1} parent=5 // pred_fallthru
      _
    %p505 = scmp.le.s32.totalorder 2, %s10
    // Predicated region
    $region49: #{softmax_loss.1} parent=5 // pred_check
      %p506 = pneg %p505
    $region50: #{softmax_loss.1} parent=5 // pred_check_branch
      %508 = sbr.rel (%p506) target = $region52
    $region51: #{softmax_loss.1} parent=5 // pred_region
      %s509 = ssub.s32 %s10, 2
      // Predicated region
      $region53: #{softmax_loss.1} parent=51 // pred_check
        %p510 = pneg %p155
      $region54: #{softmax_loss.1} parent=51 // pred_check_branch
        %512 = sbr.rel (%p510) target = $region56
      $region55: #{softmax_loss.1} parent=51 // pred_region
        %s513 = smul.u32 2, %s21
        %p514 = scmp.lt.s32.totalorder %s513, 3
        %s515 = scalar_select %p514, %s513, 3
        %s516 = smul.addr %s515, 8
        %s517 = scalar_lea.vmem %s4, %s516
      $region56: #{softmax_loss.1} parent=51 // pred_fallthru
        _
    $region52: #{softmax_loss.1} parent=5 // pred_fallthru
      _
  $region6: #{softmax_loss.1} parent=0 // loop_footer
    %s14 = sadd.s32 1, %s10
  $region7: #{softmax_loss.1} parent=0 // loop_footer_branch
    %9 = sbr.rel target = $region3
  $region8: #{softmax_loss.1} parent=0 // loop_exit
    _

</llo_original>
